<compile_context>
chip_gen: v7x
topology: tpu7x:2x2x1
jax: 0.10.0
libtpu: 0.0.40
codegen_flags: <defaults>
</compile_context>

<pallas_src>
import functools

import jax
import jax.numpy as jnp
from jax.experimental import pallas as pl
from jax.experimental.pallas import tpu as pltpu

LANE = 128


def _round_up(n, m):
    return ((n + m - 1) // m) * m


def _mlp_kernel(x_ref, w1_ref, b1_ref, w2_ref, b2_ref, w3_ref, b3_ref, o_ref):
    # fc1 + ReLU: bf16 MXU matmul, f32 accumulate, bias folded into accumulator.
    h1 = b1_ref[...] + jnp.dot(x_ref[...], w1_ref[...],
                               preferred_element_type=jnp.float32)
    h1 = jnp.maximum(h1, 0.0)
    # fc2 + ReLU
    h2 = b2_ref[...] + jnp.dot(h1.astype(w2_ref.dtype), w2_ref[...],
                               preferred_element_type=jnp.float32)
    h2 = jnp.maximum(h2, 0.0)
    # fc3 (no activation) -> lane-dense padded Q slab (A padded to 128 lanes)
    q = b3_ref[...] + jnp.dot(h2.astype(w3_ref.dtype), w3_ref[...],
                              preferred_element_type=jnp.float32)
    o_ref[...] = q.astype(o_ref.dtype)


@functools.partial(jax.jit, static_argnames=("block_b",))
def net_forward(x, params, block_b=128):
    """Fused 3-layer MLP (DQN Q-network) as a single Pallas kernel.

    x: [B, 128] float32
    params: dict with w1 [128, I], b1 [1, I], w2 [I, H], b2 [1, H],
            w3 [H, A], b3 [1, A]
    returns: [B, A] float32 Q-values
    """
    w1, b1 = params["w1"], params["b1"]
    w2, b2 = params["w2"], params["b2"]
    w3, b3 = params["w3"], params["b3"]

    B, K = x.shape
    A = w3.shape[1]

    # Batch tile: amortize per-step overhead / fill the MXU M dimension.
    TB = block_b if B >= block_b else _round_up(max(B, 1), 8)
    B_pad = _round_up(B, TB)

    # bf16 operands for the MXU (f32 accumulation inside the kernel).
    x_p = jnp.zeros((B_pad, K), jnp.bfloat16).at[:B].set(x.astype(jnp.bfloat16))
    w1b = w1.astype(jnp.bfloat16)
    w2b = w2.astype(jnp.bfloat16)
    # Lane-dense output: pad fc3 out-features to a full 128-lane slab.
    A_pad = _round_up(A, LANE)
    w3p = jnp.zeros((w3.shape[0], A_pad), jnp.bfloat16).at[:, :A].set(
        w3.astype(jnp.bfloat16))
    b3p = jnp.zeros((1, A_pad), jnp.float32).at[:, :A].set(b3.astype(jnp.float32))
    b1f = b1.astype(jnp.float32)
    b2f = b2.astype(jnp.float32)

    # Constant index_map -> weights/biases stay VMEM-resident across batch tiles.
    const = lambda a: pl.BlockSpec(a.shape, lambda i: (0,) * a.ndim)

    out_padded = pl.pallas_call(
        _mlp_kernel,
        out_shape=jax.ShapeDtypeStruct((B_pad, A_pad), jnp.float32),
        grid=(B_pad // TB,),
        in_specs=[
            pl.BlockSpec((TB, K), lambda i: (i, 0)),   # x: tiled over batch
            const(w1b), const(b1f),
            const(w2b), const(b2f),
            const(w3p), const(b3p),
        ],
        out_specs=pl.BlockSpec((TB, A_pad), lambda i: (i, 0)),
        compiler_params=pltpu.CompilerParams(
            dimension_semantics=("parallel",)),         # v7x: shard batch over 2 TCs
    )(x_p, w1b, b1f, w2b, b2f, w3p, b3p)

    return out_padded[:B, :A]


def init_params(key, input_state=128, inner=64, hidden=32, num_actions=3):
    """Deterministic PyTorch-style (uniform +/- 1/sqrt(fan_in)) init."""
    def linear(k, fan_in, fan_out):
        kw, kb = jax.random.split(k)
        bound = 1.0 / jnp.sqrt(fan_in)
        w = jax.random.uniform(kw, (fan_in, fan_out), jnp.float32, -bound, bound)
        b = jax.random.uniform(kb, (1, fan_out), jnp.float32, -bound, bound)
        return w, b

    k1, k2, k3 = jax.random.split(key, 3)
    w1, b1 = linear(k1, input_state, inner)
    w2, b2 = linear(k2, inner, hidden)
    w3, b3 = linear(k3, hidden, num_actions)
    return {"w1": w1, "b1": b1, "w2": w2, "b2": b2, "w3": w3, "b3": b3}


def net_forward_ref(x, p):
    """Reference with the same bf16-operand / f32-accumulate numerics."""
    bf = jnp.bfloat16
    h1 = jnp.maximum(jnp.dot(x.astype(bf), p["w1"].astype(bf),
                             preferred_element_type=jnp.float32) + p["b1"], 0.0)
    h2 = jnp.maximum(jnp.dot(h1.astype(bf), p["w2"].astype(bf),
                             preferred_element_type=jnp.float32) + p["b2"], 0.0)
    return jnp.dot(h2.astype(bf), p["w3"].astype(bf),
                   preferred_element_type=jnp.float32) + p["b3"]


if __name__ == "__main__":
    key = jax.random.PRNGKey(0)
    k_x, k_p, k_x2 = jax.random.split(key, 3)

    batch = 2
    input_state = 128        # fixed by the module (self.input_state = 128)
    inner_layer_size = 64    # stands in for args.inner_layer_size
    hidden_layer_size = 32   # stands in for args.hidden_layer_size
    num_actions = 3          # Freeway action space

    params = init_params(k_p, input_state, inner_layer_size,
                         hidden_layer_size, num_actions)

    # Small online-inference shaped batch (B=2, padded to 8 sublanes inside).
    x = jax.random.normal(k_x, (batch, input_state), jnp.float32)
    q = jax.block_until_ready(net_forward(x, params))
    q_ref = net_forward_ref(x, params)
    assert q.shape == (batch, num_actions)
    assert jnp.allclose(q, q_ref, atol=2e-2, rtol=2e-2)

    # Multi-tile path (grid > 1): small training-style batch with ragged size.
    x2 = jax.random.normal(k_x2, (18, input_state), jnp.float32)
    q2 = jax.block_until_ready(net_forward(x2, params, block_b=8))
    q2_ref = net_forward_ref(x2, params)
    assert q2.shape == (18, num_actions)
    assert jnp.allclose(q2, q2_ref, atol=2e-2, rtol=2e-2)

    print("KERNEL_OK")
</pallas_src>

<mosaic_0001>
module attributes {stable_mosaic.version = 11 : i64} {
  func.func @_mlp_kernel(%arg0: i32, %arg1: memref<8x128xbf16, #tpu.memory_space<vmem>>, %arg2: memref<128x64xbf16, #tpu.memory_space<vmem>>, %arg3: memref<1x64xf32, #tpu.memory_space<vmem>>, %arg4: memref<64x32xbf16, #tpu.memory_space<vmem>>, %arg5: memref<1x32xf32, #tpu.memory_space<vmem>>, %arg6: memref<32x128xbf16, #tpu.memory_space<vmem>>, %arg7: memref<1x128xf32, #tpu.memory_space<vmem>>, %arg8: memref<8x128xf32, #tpu.memory_space<vmem>>) attributes {dimension_semantics = [#tpu.dimension_semantics<parallel>], iteration_bounds = array<i64: 1>, scalar_prefetch = 0 : i64, scratch_operands = 0 : i64, tpu.core_type = #tpu.core_type<tc>, window_params = [{transform_indices = @transform_0, window_bounds = array<i64: 8, 128>}, {pipeline_mode = #tpu.pipeline_mode<synchronous>, transform_indices = @transform_1, window_bounds = array<i64: 128, 64>}, {pipeline_mode = #tpu.pipeline_mode<synchronous>, transform_indices = @transform_2, window_bounds = array<i64: 1, 64>}, {pipeline_mode = #tpu.pipeline_mode<synchronous>, transform_indices = @transform_3, window_bounds = array<i64: 64, 32>}, {pipeline_mode = #tpu.pipeline_mode<synchronous>, transform_indices = @transform_4, window_bounds = array<i64: 1, 32>}, {pipeline_mode = #tpu.pipeline_mode<synchronous>, transform_indices = @transform_5, window_bounds = array<i64: 32, 128>}, {pipeline_mode = #tpu.pipeline_mode<synchronous>, transform_indices = @transform_6, window_bounds = array<i64: 1, 128>}, {transform_indices = @transform_7, window_bounds = array<i64: 8, 128>}]} {
    %c0 = arith.constant 0 : index
    %c0_0 = arith.constant 0 : index
    %0 = vector.load %arg3[%c0, %c0_0] : memref<1x64xf32, #tpu.memory_space<vmem>>, vector<1x64xf32>
    %c0_1 = arith.constant 0 : index
    %c0_2 = arith.constant 0 : index
    %1 = vector.load %arg1[%c0_1, %c0_2] : memref<8x128xbf16, #tpu.memory_space<vmem>>, vector<8x128xbf16>
    %c0_3 = arith.constant 0 : index
    %c0_4 = arith.constant 0 : index
    %2 = vector.load %arg2[%c0_3, %c0_4] : memref<128x64xbf16, #tpu.memory_space<vmem>>, vector<128x64xbf16>
    %cst = arith.constant dense<0.000000e+00> : vector<8x64xf32>
    %3 = tpu.matmul %1, %2, %cst {dimension_numbers = #tpu.dot_dimension_numbers<[1], [0], [0], [1], [0, 0, 1, 1], [], []>} : vector<8x128xbf16>, vector<128x64xbf16>, vector<8x64xf32> -> vector<8x64xf32>
    %4 = vector.broadcast %0 : vector<1x64xf32> to vector<8x64xf32>
    %5 = arith.addf %4, %3 : vector<8x64xf32>
    %cst_5 = arith.constant 0.000000e+00 : f32
    %6 = vector.broadcast %cst_5 : f32 to vector<8x64xf32>
    %7 = arith.maximumf %5, %6 : vector<8x64xf32>
    %c0_6 = arith.constant 0 : index
    %c0_7 = arith.constant 0 : index
    %8 = vector.load %arg5[%c0_6, %c0_7] : memref<1x32xf32, #tpu.memory_space<vmem>>, vector<1x32xf32>
    %9 = arith.truncf %7 : vector<8x64xf32> to vector<8x64xbf16>
    %c0_8 = arith.constant 0 : index
    %c0_9 = arith.constant 0 : index
    %10 = vector.load %arg4[%c0_8, %c0_9] : memref<64x32xbf16, #tpu.memory_space<vmem>>, vector<64x32xbf16>
    %cst_10 = arith.constant dense<0.000000e+00> : vector<8x32xf32>
    %11 = tpu.matmul %9, %10, %cst_10 {dimension_numbers = #tpu.dot_dimension_numbers<[1], [0], [0], [1], [0, 0, 1, 1], [], []>} : vector<8x64xbf16>, vector<64x32xbf16>, vector<8x32xf32> -> vector<8x32xf32>
    %12 = vector.broadcast %8 : vector<1x32xf32> to vector<8x32xf32>
    %13 = arith.addf %12, %11 : vector<8x32xf32>
    %cst_11 = arith.constant 0.000000e+00 : f32
    %14 = vector.broadcast %cst_11 : f32 to vector<8x32xf32>
    %15 = arith.maximumf %13, %14 : vector<8x32xf32>
    %c0_12 = arith.constant 0 : index
    %c0_13 = arith.constant 0 : index
    %16 = vector.load %arg7[%c0_12, %c0_13] : memref<1x128xf32, #tpu.memory_space<vmem>>, vector<1x128xf32>
    %17 = arith.truncf %15 : vector<8x32xf32> to vector<8x32xbf16>
    %c0_14 = arith.constant 0 : index
    %c0_15 = arith.constant 0 : index
    %18 = vector.load %arg6[%c0_14, %c0_15] : memref<32x128xbf16, #tpu.memory_space<vmem>>, vector<32x128xbf16>
    %cst_16 = arith.constant dense<0.000000e+00> : vector<8x128xf32>
    %19 = tpu.matmul %17, %18, %cst_16 {dimension_numbers = #tpu.dot_dimension_numbers<[1], [0], [0], [1], [0, 0, 1, 1], [], []>} : vector<8x32xbf16>, vector<32x128xbf16>, vector<8x128xf32> -> vector<8x128xf32>
    %20 = vector.broadcast %16 : vector<1x128xf32> to vector<8x128xf32>
    %21 = arith.addf %20, %19 : vector<8x128xf32>
    %c0_17 = arith.constant 0 : index
    %c0_18 = arith.constant 0 : index
    %22 = vector.load %arg8[%c0_17, %c0_18] : memref<8x128xf32, #tpu.memory_space<vmem>>, vector<8x128xf32>
    tpu.vector_store %arg8[%c0_17, %c0_18], %21 {strides = array<i32>} : memref<8x128xf32, #tpu.memory_space<vmem>>, vector<8x128xf32>,
    return
  }
  func.func @transform_0(%arg0: i32) -> (i32, i32) {
    %c0_i32 = arith.constant 0 : i32
    %c0_i32_0 = arith.constant 0 : i32
    return %arg0, %c0_i32 : i32, i32
  }
  func.func @transform_1(%arg0: i32) -> (i32, i32) {
    %c0_i32 = arith.constant 0 : i32
    %c0_i32_0 = arith.constant 0 : i32
    %c0_i32_1 = arith.constant 0 : i32
    return %c0_i32, %c0_i32_0 : i32, i32
  }
  func.func @transform_2(%arg0: i32) -> (i32, i32) {
    %c0_i32 = arith.constant 0 : i32
    %c0_i32_0 = arith.constant 0 : i32
    %c0_i32_1 = arith.constant 0 : i32
    return %c0_i32, %c0_i32_0 : i32, i32
  }
  func.func @transform_3(%arg0: i32) -> (i32, i32) {
    %c0_i32 = arith.constant 0 : i32
    %c0_i32_0 = arith.constant 0 : i32
    %c0_i32_1 = arith.constant 0 : i32
    return %c0_i32, %c0_i32_0 : i32, i32
  }
  func.func @transform_4(%arg0: i32) -> (i32, i32) {
    %c0_i32 = arith.constant 0 : i32
    %c0_i32_0 = arith.constant 0 : i32
    %c0_i32_1 = arith.constant 0 : i32
    return %c0_i32, %c0_i32_0 : i32, i32
  }
  func.func @transform_5(%arg0: i32) -> (i32, i32) {
    %c0_i32 = arith.constant 0 : i32
    %c0_i32_0 = arith.constant 0 : i32
    %c0_i32_1 = arith.constant 0 : i32
    return %c0_i32, %c0_i32_0 : i32, i32
  }
  func.func @transform_6(%arg0: i32) -> (i32, i32) {
    %c0_i32 = arith.constant 0 : i32
    %c0_i32_0 = arith.constant 0 : i32
    %c0_i32_1 = arith.constant 0 : i32
    return %c0_i32, %c0_i32_0 : i32, i32
  }
  func.func @transform_7(%arg0: i32) -> (i32, i32) {
    %c0_i32 = arith.constant 0 : i32
    %c0_i32_0 = arith.constant 0 : i32
    return %arg0, %c0_i32 : i32, i32
  }
}

</mosaic_0001>

<llo_original>
// kernel: net_forward.1
$region0: #{net_forward.1}
  #allocation0 [shape = 'u32[]', space=smem, size = 0x4, offset = 0x4, fixed_abs, tag = 'smem constant byte address 0x4 - core index']
  #allocation1 [shape = 'u32[144,128]{1,0:T(1,128)}', space=vmem, size = 0x12000, scoped, tag = 'internal scratch']
  %s0 = inlined_call_operand.vmem [shape: bf16[8,128], index: 0, kind: input, shape index: {}]
  %s1 = inlined_call_operand.vmem [shape: bf16[128,64], index: 1, kind: input, shape index: {}]
  %s2 = inlined_call_operand.vmem [shape: f32[1,64], index: 2, kind: input, shape index: {}]
  %s3 = inlined_call_operand.vmem [shape: bf16[64,32], index: 3, kind: input, shape index: {}]
  %s4 = inlined_call_operand.vmem [shape: f32[1,32], index: 4, kind: input, shape index: {}]
  %s5 = inlined_call_operand.vmem [shape: bf16[32,128], index: 5, kind: input, shape index: {}]
  %s6 = inlined_call_operand.vmem [shape: f32[1,128], index: 6, kind: input, shape index: {}]
  %s7 = inlined_call_operand.vmem [shape: f32[8,128], index: 7, kind: output, shape index: {}]
  %s8 = sld [smem:[#allocation0]]
  $region38: #{net_forward.1} parent=0
    _
  %s10 = ssub.s32 1, %s8
  %s11 = scalar_select 0, %s10, %s8
  // Predicated region
  $region2: #{net_forward.1} parent=0 // pred_check
    _
  $region3: #{net_forward.1} parent=0 // pred_check_branch
    %13 = sbr.rel (0) target = $region5
  $region4: #{net_forward.1} parent=0 // pred_region
    _
  $region5: #{net_forward.1} parent=0 // pred_fallthru
    _
  // Predicated region
  $region6: #{net_forward.1} parent=0 // pred_check
    _
  $region7: #{net_forward.1} parent=0 // pred_check_branch
    %15 = sbr.rel (0) target = $region9
  $region8: #{net_forward.1} parent=0 // pred_region
    _
  $region9: #{net_forward.1} parent=0 // pred_fallthru
    _
  // Predicated region
  $region10: #{net_forward.1} parent=0 // pred_check
    _
  $region11: #{net_forward.1} parent=0 // pred_check_branch
    %17 = sbr.rel (0) target = $region13
  $region12: #{net_forward.1} parent=0 // pred_region
    _
  $region13: #{net_forward.1} parent=0 // pred_fallthru
    _
  // Predicated region
  $region14: #{net_forward.1} parent=0 // pred_check
    _
  $region15: #{net_forward.1} parent=0 // pred_check_branch
    %19 = sbr.rel (0) target = $region17
  $region16: #{net_forward.1} parent=0 // pred_region
    _
  $region17: #{net_forward.1} parent=0 // pred_fallthru
    _
  // Predicated region
  $region18: #{net_forward.1} parent=0 // pred_check
    _
  $region19: #{net_forward.1} parent=0 // pred_check_branch
    %21 = sbr.rel (0) target = $region21
  $region20: #{net_forward.1} parent=0 // pred_region
    _
  $region21: #{net_forward.1} parent=0 // pred_fallthru
    _
  // Predicated region
  $region22: #{net_forward.1} parent=0 // pred_check
    _
  $region23: #{net_forward.1} parent=0 // pred_check_branch
    %23 = sbr.rel (0) target = $region25
  $region24: #{net_forward.1} parent=0 // pred_region
    _
  $region25: #{net_forward.1} parent=0 // pred_fallthru
    _
  // Predicated region
  $region26: #{net_forward.1} parent=0 // pred_check
    _
  $region27: #{net_forward.1} parent=0 // pred_check_branch
    %25 = sbr.rel (0) target = $region29
  $region28: #{net_forward.1} parent=0 // pred_region
    _
  $region29: #{net_forward.1} parent=0 // pred_fallthru
    _
  %v27 = vld [vmem:[%s2] sm:$0x1]
  %v28 = vld [vmem:[%s0] sm:$0xf]
  %v29 = vld [vmem:[%s1] sm:$0xf]
  %v30 = vld [vmem:[%s1 + $0x4] sm:$0xf]
  %v31 = vld [vmem:[%s1 + $0x8] sm:$0xf]
  %v32 = vld [vmem:[%s1 + $0xc] sm:$0xf]
  %v33 = vld [vmem:[%s1 + $0x10] sm:$0xf]
  %v34 = vld [vmem:[%s1 + $0x14] sm:$0xf]
  %v35 = vld [vmem:[%s1 + $0x18] sm:$0xf]
  %v36 = vld [vmem:[%s1 + $0x1c] sm:$0xf]
  %v37 = vld [vmem:[%s1 + $0x20] sm:$0xf]
  %v38 = vld [vmem:[%s1 + $0x24] sm:$0xf]
  %v39 = vld [vmem:[%s1 + $0x28] sm:$0xf]
  %v40 = vld [vmem:[%s1 + $0x2c] sm:$0xf]
  %v41 = vld [vmem:[%s1 + $0x30] sm:$0xf]
  %v42 = vld [vmem:[%s1 + $0x34] sm:$0xf]
  %v43 = vld [vmem:[%s1 + $0x38] sm:$0xf]
  %v44 = vld [vmem:[%s1 + $0x3c] sm:$0xf]
  %v61 = vunpack.c.l.b16 %v29
  %v62 = vunpack.c.l.b16 %v30
  %v63 = vunpack.c.l.b16 %v31
  %v64 = vunpack.c.l.b16 %v32
  %v65 = vunpack.c.l.b16 %v33
  %v66 = vunpack.c.l.b16 %v34
  %v67 = vunpack.c.l.b16 %v35
  %v68 = vunpack.c.l.b16 %v36
  %v69 = vunpack.c.l.b16 %v37
  %v70 = vunpack.c.l.b16 %v38
  %v71 = vunpack.c.l.b16 %v39
  %v72 = vunpack.c.l.b16 %v40
  %v73 = vunpack.c.l.b16 %v41
  %v74 = vunpack.c.l.b16 %v42
  %v75 = vunpack.c.l.b16 %v43
  %v76 = vunpack.c.l.b16 %v44
  %v77 = vpack.c.b16 %v62, %v61
  %v78 = vpack.c.b16 %v64, %v63
  %v79 = vpack.c.b16 %v66, %v65
  %v80 = vpack.c.b16 %v68, %v67
  %v81 = vpack.c.b16 %v70, %v69
  %v82 = vpack.c.b16 %v72, %v71
  %v83 = vpack.c.b16 %v74, %v73
  %v84 = vpack.c.b16 %v76, %v75
  %93 = vmatprep.subr.bf16.mxu0 0
  %94 = vmatpush1.bf16.msra.mxu0 %v77
  %95 = vmatprep.subr.bf16.mxu0 0
  %96 = vmatpush1.bf16.msra.mxu0 %v78
  %97 = vmatprep.subr.bf16.mxu0 0
  %98 = vmatpush1.bf16.msra.mxu0 %v79
  %99 = vmatprep.subr.bf16.mxu0 0
  %100 = vmatpush1.bf16.msra.mxu0 %v80
  %101 = vmatprep.subr.bf16.mxu0 0
  %102 = vmatpush1.bf16.msra.mxu0 %v81
  %103 = vmatprep.subr.bf16.mxu0 0
  %104 = vmatpush1.bf16.msra.mxu0 %v82
  %105 = vmatprep.subr.bf16.mxu0 0
  %106 = vmatpush1.bf16.msra.mxu0 %v83
  %107 = vmatprep.subr.bf16.mxu0 0
  %108 = vmatpush1.bf16.msra.mxu0 %v84
  %109 = vmatprep.subr.bf16.mxu0 0
  %110 = vmatpush1.bf16.msra.mxu0 0
  %111 = vmatprep.subr.bf16.mxu0 0
  %112 = vmatpush1.bf16.msra.mxu0 0
  %113 = vmatprep.subr.bf16.mxu0 0
  %114 = vmatpush1.bf16.msra.mxu0 0
  %115 = vmatprep.subr.bf16.mxu0 0
  %116 = vmatpush1.bf16.msra.mxu0 0
  %117 = vmatprep.subr.bf16.mxu0 0
  %118 = vmatpush1.bf16.msra.mxu0 0
  %119 = vmatprep.subr.bf16.mxu0 0
  %120 = vmatpush1.bf16.msra.mxu0 0
  %121 = vmatprep.subr.bf16.mxu0 0
  %122 = vmatpush1.bf16.msra.mxu0 0
  %123 = vmatprep.subr.bf16.mxu0 0
  %124 = vmatpush1.bf16.msra.mxu0 0
  %125 = vmatprep.mubr.bf16.mxu0 0
  %126 = vmatmul.mubr.bf16.gmra.mrb[0].mxu0 %v28
  %v127 = vpop.f32.mrb[0].mxu0
  %v128 = vadd.f32 0.0, %v127
  %v129 = vpop.f32.mrb[0].mxu0
  %v130 = vpop.f32.mrb[0].mxu0
  %v131 = vpop.f32.mrb[0].mxu0
  %132 = vdwg.mxu0
  %v134 = vlaneseq
  %v135 = vshrl.u32 %v134, 7
  %v136 = vsub.s32 0, %v135
  %v137 = vrot.slane %v27, %v136
  %v139 = vadd.f32 %v137, %v128
  %v140 = vmax.f32 %v139, 0.0
  %v141 = vld [vmem:[%s4] sm:$0x1]
  %v142 = vpack.c.bf16 %v140, %v140
  %v143 = vld [vmem:[%s3] sm:$0xf]
  %v144 = vld [vmem:[%s3 + $0x4] sm:$0xf]
  %v145 = vld [vmem:[%s3 + $0x8] sm:$0xf]
  %v146 = vld [vmem:[%s3 + $0xc] sm:$0xf]
  %v147 = vld [vmem:[%s3 + $0x10] sm:$0xf]
  %v148 = vld [vmem:[%s3 + $0x14] sm:$0xf]
  %v149 = vld [vmem:[%s3 + $0x18] sm:$0xf]
  %v150 = vld [vmem:[%s3 + $0x1c] sm:$0xf]
  %v159 = vunpack.c.l.b16 %v143
  %v160 = vunpack.c.l.b16 %v144
  %v161 = vunpack.c.l.b16 %v145
  %v162 = vunpack.c.l.b16 %v146
  %v163 = vunpack.c.l.b16 %v147
  %v164 = vunpack.c.l.b16 %v148
  %v165 = vunpack.c.l.b16 %v149
  %v166 = vunpack.c.l.b16 %v150
  %v167 = vpack.c.b16 %v160, %v159
  %v168 = vpack.c.b16 %v162, %v161
  %v169 = vpack.c.b16 %v164, %v163
  %v170 = vpack.c.b16 %v166, %v165
  %vm175 = vcmask 523264
  %v177 = vsel %vm175, %v142, 0
  %179 = vmatprep.subr.bf16.mxu0 0
  %180 = vmatpush1.bf16.msra.mxu0 %v167
  %181 = vmatprep.subr.bf16.mxu0 0
  %182 = vmatpush1.bf16.msra.mxu0 %v168
  %183 = vmatprep.subr.bf16.mxu0 0
  %184 = vmatpush1.bf16.msra.mxu0 %v169
  %185 = vmatprep.subr.bf16.mxu0 0
  %186 = vmatpush1.bf16.msra.mxu0 %v170
  %187 = vmatprep.subr.bf16.mxu0 0
  %188 = vmatpush1.bf16.msra.mxu0 0
  %189 = vmatprep.subr.bf16.mxu0 0
  %190 = vmatpush1.bf16.msra.mxu0 0
  %191 = vmatprep.subr.bf16.mxu0 0
  %192 = vmatpush1.bf16.msra.mxu0 0
  %193 = vmatprep.subr.bf16.mxu0 0
  %194 = vmatpush1.bf16.msra.mxu0 0
  %195 = vmatprep.subr.bf16.mxu0 0
  %196 = vmatpush1.bf16.msra.mxu0 0
  %197 = vmatprep.subr.bf16.mxu0 0
  %198 = vmatpush1.bf16.msra.mxu0 0
  %199 = vmatprep.subr.bf16.mxu0 0
  %200 = vmatpush1.bf16.msra.mxu0 0
  %201 = vmatprep.subr.bf16.mxu0 0
  %202 = vmatpush1.bf16.msra.mxu0 0
  %203 = vmatprep.subr.bf16.mxu0 0
  %204 = vmatpush1.bf16.msra.mxu0 0
  %205 = vmatprep.subr.bf16.mxu0 0
  %206 = vmatpush1.bf16.msra.mxu0 0
  %207 = vmatprep.subr.bf16.mxu0 0
  %208 = vmatpush1.bf16.msra.mxu0 0
  %209 = vmatprep.subr.bf16.mxu0 0
  %210 = vmatpush1.bf16.msra.mxu0 0
  %211 = vmatprep.mubr.bf16.mxu0 0
  %212 = vmatmul.mubr.bf16.gmra.mrb[0].mxu0 %v177
  %v213 = vpop.f32.mrb[0].mxu0
  %v214 = vadd.f32 0.0, %v213
  %v215 = vpop.f32.mrb[0].mxu0
  %v216 = vpop.f32.mrb[0].mxu0
  %v217 = vpop.f32.mrb[0].mxu0
  %218 = vdwg.mxu0
  %v220 = vlaneseq
  %v221 = vshrl.u32 %v220, 7
  %v222 = vsub.s32 0, %v221
  %v223 = vrot.slane %v141, %v222
  %v225 = vadd.f32 %v223, %v214
  %v226 = vmax.f32 %v225, 0.0
  %v227 = vld [vmem:[%s6] sm:$0x1]
  %v228 = vpack.c.bf16 %v226, %v226
  %v229 = vld [vmem:[%s5] sm:$0xf]
  %v230 = vld [vmem:[%s5 + $0x4] sm:$0xf]
  %v231 = vld [vmem:[%s5 + $0x8] sm:$0xf]
  %v232 = vld [vmem:[%s5 + $0xc] sm:$0xf]
  %v237 = vunpack.c.l.b16 %v229
  %v238 = vunpack.c.l.b16 %v230
  %v239 = vunpack.c.l.b16 %v231
  %v240 = vunpack.c.l.b16 %v232
  %v241 = vpack.c.b16 %v238, %v237
  %v242 = vpack.c.b16 %v240, %v239
  %vm245 = vcmask 261120
  %v247 = vsel %vm245, %v228, 0
  %249 = vmatprep.subr.bf16.mxu0 0
  %250 = vmatpush1.bf16.msra.mxu0 %v241
  %251 = vmatprep.subr.bf16.mxu0 0
  %252 = vmatpush1.bf16.msra.mxu0 %v242
  %253 = vmatprep.subr.bf16.mxu0 0
  %254 = vmatpush1.bf16.msra.mxu0 0
  %255 = vmatprep.subr.bf16.mxu0 0
  %256 = vmatpush1.bf16.msra.mxu0 0
  %257 = vmatprep.subr.bf16.mxu0 0
  %258 = vmatpush1.bf16.msra.mxu0 0
  %259 = vmatprep.subr.bf16.mxu0 0
  %260 = vmatpush1.bf16.msra.mxu0 0
  %261 = vmatprep.subr.bf16.mxu0 0
  %262 = vmatpush1.bf16.msra.mxu0 0
  %263 = vmatprep.subr.bf16.mxu0 0
  %264 = vmatpush1.bf16.msra.mxu0 0
  %265 = vmatprep.subr.bf16.mxu0 0
  %266 = vmatpush1.bf16.msra.mxu0 0
  %267 = vmatprep.subr.bf16.mxu0 0
  %268 = vmatpush1.bf16.msra.mxu0 0
  %269 = vmatprep.subr.bf16.mxu0 0
  %270 = vmatpush1.bf16.msra.mxu0 0
  %271 = vmatprep.subr.bf16.mxu0 0
  %272 = vmatpush1.bf16.msra.mxu0 0
  %273 = vmatprep.subr.bf16.mxu0 0
  %274 = vmatpush1.bf16.msra.mxu0 0
  %275 = vmatprep.subr.bf16.mxu0 0
  %276 = vmatpush1.bf16.msra.mxu0 0
  %277 = vmatprep.subr.bf16.mxu0 0
  %278 = vmatpush1.bf16.msra.mxu0 0
  %279 = vmatprep.subr.bf16.mxu0 0
  %280 = vmatpush1.bf16.msra.mxu0 0
  %281 = vmatprep.mubr.bf16.mxu0 0
  %282 = vmatmul.mubr.bf16.gmra.mrb[0].mxu0 %v247
  %v283 = vpop.f32.mrb[0].mxu0
  %v284 = vadd.f32 0.0, %v283
  %v285 = vpop.f32.mrb[0].mxu0
  %v286 = vpop.f32.mrb[0].mxu0
  %v287 = vpop.f32.mrb[0].mxu0
  %288 = vdwg.mxu0
  %v290 = vlaneseq
  %v291 = vshrl.u32 %v290, 7
  %v292 = vsub.s32 0, %v291
  %v293 = vrot.slane %v227, %v292
  %v295 = vadd.f32 %v293, %v284
  %296 = vst [vmem:[%s7] sm:$0xff] %v295
  // Predicated region
  $region30: #{net_forward.1} parent=0 // pred_check
    _
  $region31: #{net_forward.1} parent=0 // pred_check_branch
    %298 = sbr.rel (0) target = $region33
  $region32: #{net_forward.1} parent=0 // pred_region
    _
  $region33: #{net_forward.1} parent=0 // pred_fallthru
    _
  // Predicated region
  $region34: #{net_forward.1} parent=0 // pred_check
    _
  $region35: #{net_forward.1} parent=0 // pred_check_branch
    %300 = sbr.rel (0) target = $region37
  $region36: #{net_forward.1} parent=0 // pred_region
    _
  $region37: #{net_forward.1} parent=0 // pred_fallthru
    _

</llo_original>
